<compile_context>
chip_gen: v5e
topology: v5e:2x2
jax: 0.10.0
libtpu: 0.0.40
codegen_flags: <defaults>
</compile_context>

<pallas_src>
import math
import functools

import jax
import jax.numpy as jnp
from jax.experimental import pallas as pl
from jax.experimental.pallas import tpu as pltpu


def _mhatt_kernel(v_ref, k_ref, q_ref, m_ref,
                  wv_ref, bv_ref, wk_ref, bk_ref, wq_ref, bq_ref,
                  wm_ref, bm_ref, o_ref, ctx_ref,
                  *, num_heads, head_dim, block_b, seq_len, mm_dtype):
    H = num_heads * head_dim
    M = block_b * seq_len
    BH = num_heads * block_b

    # --- Q/K/V projections: three full-width (M,H)@(H,H) MXU dots.
    #     Weights are pre-transposed and VMEM-resident (constant index maps);
    #     1/sqrt(head_dim) is folded into the Q weight/bias in the wrapper.
    vp = jnp.dot(v_ref[...].astype(mm_dtype), wv_ref[...],
                 preferred_element_type=jnp.float32) + bv_ref[...]
    kp = jnp.dot(k_ref[...].astype(mm_dtype), wk_ref[...],
                 preferred_element_type=jnp.float32) + bk_ref[...]
    qp = jnp.dot(q_ref[...].astype(mm_dtype), wq_ref[...],
                 preferred_element_type=jnp.float32) + bq_ref[...]

    # --- Split heads into a leading batch dim: (M, H) -> (num_heads*block_b, S, dh).
    #     Only static lane slices, leading-dim reshapes and a leading-axis concat
    #     (no 4-D transposes), ordering is head-major then batch.
    def split_heads(x):
        return jnp.concatenate(
            [x[:, h * head_dim:(h + 1) * head_dim]
              .astype(mm_dtype)
              .reshape(block_b, seq_len, head_dim)
             for h in range(num_heads)],
            axis=0)                                          # (BH, S, dh)

    qh = split_heads(qp)
    kh = split_heads(kp)
    vh = split_heads(vp)

    # --- Scores for ALL heads in one batched MXU einsum. ---
    s = jnp.einsum("bqd,bkd->bqk", qh, kh,
                   preferred_element_type=jnp.float32)       # (BH, S, S) f32

    # Additive key mask (0 / -1e9), broadcast once over heads and query rows.
    s = (s.reshape(num_heads, block_b, seq_len, seq_len) + m_ref[...]
         ).reshape(BH, seq_len, seq_len)

    # --- Softmax in f32; the divide uses the otherwise-idle EUP reciprocal. ---
    s_max = jnp.max(s, axis=-1, keepdims=True)
    e = jnp.exp(s - s_max)
    denom = jnp.sum(e, axis=-1, keepdims=True)
    att = e * pl.reciprocal(denom, approx=True)

    # TODO(synk): nn.Dropout on the attention map is identity in eval mode;
    # training-mode dropout (pltpu.prng_random_bits mask) is not implemented.

    # --- Context for ALL heads in one batched MXU einsum. ---
    ctx = jnp.einsum("bqk,bkd->bqd", att.astype(mm_dtype), vh,
                     preferred_element_type=jnp.float32)     # (BH, S, dh) f32

    # --- Merge heads into a lane-contiguous (M, H) VMEM slab, then ONE
    #     (M,H)@(H,H) output projection (K = H), bias added once. ---
    for h in range(num_heads):
        ctx_ref[:, h * head_dim:(h + 1) * head_dim] = (
            ctx[h * block_b:(h + 1) * block_b]
            .reshape(M, head_dim).astype(ctx_ref.dtype))

    out = jnp.dot(ctx_ref[...], wm_ref[...],
                  preferred_element_type=jnp.float32) + bm_ref[...]
    o_ref[...] = out.astype(o_ref.dtype)                     # lane-contiguous (M, H) store


def _pick_block_b(B, S, target_rows=512, min_grid_steps=1):
    """Largest divisor of B with block_b*S <= target_rows rows per grid step.

    min_grid_steps: set >= 2 on v7x so the 'parallel' grid axis can be sharded
    across its two TensorCores; 1 is fine on v5e/v6e (single TC).
    """
    best = 1
    for cand in range(1, B + 1):
        if B % cand:
            continue
        if B // cand < min_grid_steps:
            continue
        if cand * S <= max(target_rows, S):
            best = cand
    return best


def mhatt_pallas(v, k, q, mask, params, *, num_heads, head_dim,
                 block_b=None, compute_dtype=jnp.bfloat16,
                 target_rows=512, min_grid_steps=1, vmem_limit_mb=32):
    """v, k, q: [B, S, H] float32; mask: [B, 1, 1, S] bool (True = masked key)."""
    B, S, H = q.shape
    assert num_heads * head_dim == H

    # Pad sequence length to a sublane multiple of 8; padded keys are masked out.
    S_pad = ((S + 7) // 8) * 8
    pad = S_pad - S
    if pad:
        zpad = ((0, 0), (0, pad), (0, 0))
        v = jnp.pad(v, zpad)
        k = jnp.pad(k, zpad)
        q = jnp.pad(q, zpad)

    key_masked = mask.reshape(B, S)                      # True = masked key position
    if pad:
        key_masked = jnp.pad(key_masked, ((0, 0), (0, pad)), constant_values=True)
    mask_add = jnp.where(key_masked, jnp.float32(-1e9),
                         jnp.float32(0.0)).reshape(B, 1, S_pad)

    if block_b is None:
        block_b = _pick_block_b(B, S_pad, target_rows=target_rows,
                                min_grid_steps=min_grid_steps)
    assert B % block_b == 0
    grid_b = B // block_b
    M = block_b * S_pad

    scale = 1.0 / math.sqrt(head_dim)

    # One-time parameter plumbing (transposes / scale folding OUTSIDE the kernel).
    # Weights cast to the MXU operand dtype; biases stay f32 (added post-matmul).
    wv_t = params["wv"].T.astype(compute_dtype)
    wk_t = params["wk"].T.astype(compute_dtype)
    wq_t = (params["wq"].T * scale).astype(compute_dtype)
    wm_t = params["wm"].T.astype(compute_dtype)
    bv = params["bv"].reshape(1, H).astype(jnp.float32)
    bk = params["bk"].reshape(1, H).astype(jnp.float32)
    bq = (params["bq"] * scale).reshape(1, H).astype(jnp.float32)
    bm = params["bm"].reshape(1, H).astype(jnp.float32)

    # Flatten (B, S_pad, H) -> (B*S_pad, H); activations keep their input dtype
    # (cast to compute_dtype happens in-kernel, avoiding an extra HBM round trip).
    v2 = v.reshape(B * S_pad, H)
    k2 = k.reshape(B * S_pad, H)
    q2 = q.reshape(B * S_pad, H)

    kernel = functools.partial(_mhatt_kernel, num_heads=num_heads, head_dim=head_dim,
                               block_b=block_b, seq_len=S_pad, mm_dtype=compute_dtype)

    row_map = lambda g: (g, 0)        # activations / output: block g of batch rows
    const2 = lambda g: (0, 0)         # weights / biases: VMEM-resident across steps

    out_flat = pl.pallas_call(
        kernel,
        out_shape=jax.ShapeDtypeStruct((B * S_pad, H), q.dtype),
        grid_spec=pltpu.PrefetchScalarGridSpec(
            num_scalar_prefetch=0,
            grid=(grid_b,),
            in_specs=[
                pl.BlockSpec((M, H), row_map),                        # v
                pl.BlockSpec((M, H), row_map),                        # k
                pl.BlockSpec((M, H), row_map),                        # q
                pl.BlockSpec((block_b, 1, S_pad), lambda g: (g, 0, 0)),  # additive mask
                pl.BlockSpec((H, H), const2),                         # wv^T
                pl.BlockSpec((1, H), const2),                         # bv
                pl.BlockSpec((H, H), const2),                         # wk^T
                pl.BlockSpec((1, H), const2),                         # bk
                pl.BlockSpec((H, H), const2),                         # wq^T (pre-scaled)
                pl.BlockSpec((1, H), const2),                         # bq (pre-scaled)
                pl.BlockSpec((H, H), const2),                         # wm^T
                pl.BlockSpec((1, H), const2),                         # bm
            ],
            out_specs=pl.BlockSpec((M, H), row_map),
            scratch_shapes=[pltpu.VMEM((M, H), compute_dtype)],       # merged-head slab
        ),
        compiler_params=pltpu.CompilerParams(
            dimension_semantics=("parallel",),
            vmem_limit_bytes=vmem_limit_mb * 1024 * 1024),
    )(v2, k2, q2, mask_add, wv_t, bv, wk_t, bk, wq_t, bq, wm_t, bm)

    return out_flat.reshape(B, S_pad, H)[:, :S, :]


def mhatt_reference(v, k, q, mask, params, *, num_heads, head_dim):
    """Pure-JAX reference mirroring the PyTorch forward (eval mode)."""
    B, S, H = q.shape

    def lin(x, w, b):
        return jnp.einsum("bsh,oh->bso", x, w) + b

    vp = lin(v, params["wv"], params["bv"]).reshape(B, S, num_heads, head_dim).transpose(0, 2, 1, 3)
    kp = lin(k, params["wk"], params["bk"]).reshape(B, S, num_heads, head_dim).transpose(0, 2, 1, 3)
    qp = lin(q, params["wq"], params["bq"]).reshape(B, S, num_heads, head_dim).transpose(0, 2, 1, 3)

    scores = jnp.einsum("bhqd,bhkd->bhqk", qp, kp) / math.sqrt(head_dim)
    scores = jnp.where(mask, -1e9, scores)
    att = jax.nn.softmax(scores, axis=-1)
    atted = jnp.einsum("bhqk,bhkd->bhqd", att, vp)
    atted = atted.transpose(0, 2, 1, 3).reshape(B, S, H)
    return lin(atted, params["wm"], params["bm"])


if __name__ == "__main__":
    # __C config: hidden_size=32, multi_head=4, hidden_size_head=8
    B, S, H = 2, 8, 32
    NUM_HEADS, HEAD_DIM = 4, 8

    key = jax.random.PRNGKey(0)
    keys = jax.random.split(key, 12)

    def init_linear(kw, kb, fan_in):
        bound = 1.0 / math.sqrt(fan_in)
        w = jax.random.uniform(kw, (H, H), jnp.float32, -bound, bound)
        b = jax.random.uniform(kb, (H,), jnp.float32, -bound, bound)
        return w, b

    wv, bv = init_linear(keys[0], keys[1], H)
    wk, bk = init_linear(keys[2], keys[3], H)
    wq, bq = init_linear(keys[4], keys[5], H)
    wm, bm = init_linear(keys[6], keys[7], H)
    params = dict(wv=wv, bv=bv, wk=wk, bk=bk, wq=wq, bq=bq, wm=wm, bm=bm)

    v = jax.random.normal(keys[8], (B, S, H), jnp.float32)
    k = jax.random.normal(keys[9], (B, S, H), jnp.float32)
    q = jax.random.normal(keys[10], (B, S, H), jnp.float32)
    # mask: [B, 1, 1, S] bool, True = masked-out key position (last 2 keys of batch 1)
    mask = jnp.zeros((B, 1, 1, S), dtype=bool).at[1, :, :, -2:].set(True)

    ref = mhatt_reference(v, k, q, mask, params, num_heads=NUM_HEADS, head_dim=HEAD_DIM)

    # f32 MXU-operand path: closest parity with the PyTorch/JAX reference.
    # Tolerance covers the EUP approximate reciprocal in the softmax and the
    # MXU's default-precision f32 matmul passes.
    out_f32 = mhatt_pallas(v, k, q, mask, params, num_heads=NUM_HEADS, head_dim=HEAD_DIM,
                           compute_dtype=jnp.float32)
    out_f32 = jax.block_until_ready(out_f32)
    assert out_f32.shape == (B, S, H)
    assert jnp.allclose(out_f32, ref, atol=2e-2, rtol=2e-2), "f32 path mismatch vs reference"

    # bf16 MXU-operand path (recommended default on v5e/v6e/v7x); softmax and
    # accumulation stay f32, so only operand rounding differs from the reference.
    out_bf16 = mhatt_pallas(v, k, q, mask, params, num_heads=NUM_HEADS, head_dim=HEAD_DIM)
    out_bf16 = jax.block_until_ready(out_bf16)
    assert out_bf16.shape == (B, S, H)
    assert jnp.allclose(out_bf16, ref, atol=1e-1, rtol=1e-1), "bf16 path mismatch vs reference"

    print("KERNEL_OK")
</pallas_src>

<mosaic_0001>
module attributes {stable_mosaic.version = 11 : i64} {
  func.func @_mhatt_kernel(%arg0: i32, %arg1: memref<16x32xf32, #tpu.memory_space<vmem>>, %arg2: memref<16x32xf32, #tpu.memory_space<vmem>>, %arg3: memref<16x32xf32, #tpu.memory_space<vmem>>, %arg4: memref<2x1x8xf32, #tpu.memory_space<vmem>>, %arg5: memref<32x32xf32, #tpu.memory_space<vmem>>, %arg6: memref<1x32xf32, #tpu.memory_space<vmem>>, %arg7: memref<32x32xf32, #tpu.memory_space<vmem>>, %arg8: memref<1x32xf32, #tpu.memory_space<vmem>>, %arg9: memref<32x32xf32, #tpu.memory_space<vmem>>, %arg10: memref<1x32xf32, #tpu.memory_space<vmem>>, %arg11: memref<32x32xf32, #tpu.memory_space<vmem>>, %arg12: memref<1x32xf32, #tpu.memory_space<vmem>>, %arg13: memref<16x32xf32, #tpu.memory_space<vmem>>, %arg14: memref<16x32xf32, #tpu.memory_space<vmem>>) attributes {dimension_semantics = [#tpu.dimension_semantics<parallel>], iteration_bounds = array<i64: 1>, scalar_prefetch = 0 : i64, scratch_operands = 1 : i64, tpu.core_type = #tpu.core_type<tc>, window_params = [{transform_indices = @transform_0, window_bounds = array<i64: 16, 32>}, {transform_indices = @transform_1, window_bounds = array<i64: 16, 32>}, {transform_indices = @transform_2, window_bounds = array<i64: 16, 32>}, {transform_indices = @transform_3, window_bounds = array<i64: 2, 1, 8>}, {pipeline_mode = #tpu.pipeline_mode<synchronous>, transform_indices = @transform_4, window_bounds = array<i64: 32, 32>}, {pipeline_mode = #tpu.pipeline_mode<synchronous>, transform_indices = @transform_5, window_bounds = array<i64: 1, 32>}, {pipeline_mode = #tpu.pipeline_mode<synchronous>, transform_indices = @transform_6, window_bounds = array<i64: 32, 32>}, {pipeline_mode = #tpu.pipeline_mode<synchronous>, transform_indices = @transform_7, window_bounds = array<i64: 1, 32>}, {pipeline_mode = #tpu.pipeline_mode<synchronous>, transform_indices = @transform_8, window_bounds = array<i64: 32, 32>}, {pipeline_mode = #tpu.pipeline_mode<synchronous>, transform_indices = @transform_9, window_bounds = array<i64: 1, 32>}, {pipeline_mode = #tpu.pipeline_mode<synchronous>, transform_indices = @transform_10, window_bounds = array<i64: 32, 32>}, {pipeline_mode = #tpu.pipeline_mode<synchronous>, transform_indices = @transform_11, window_bounds = array<i64: 1, 32>}, {transform_indices = @transform_12, window_bounds = array<i64: 16, 32>}]} {
    %c0 = arith.constant 0 : index
    %c0_0 = arith.constant 0 : index
    %0 = vector.load %arg1[%c0, %c0_0] : memref<16x32xf32, #tpu.memory_space<vmem>>, vector<16x32xf32>
    %c0_1 = arith.constant 0 : index
    %c0_2 = arith.constant 0 : index
    %1 = vector.load %arg5[%c0_1, %c0_2] : memref<32x32xf32, #tpu.memory_space<vmem>>, vector<32x32xf32>
    %cst = arith.constant dense<0.000000e+00> : vector<16x32xf32>
    %2 = tpu.matmul %0, %1, %cst {dimension_numbers = #tpu.dot_dimension_numbers<[1], [0], [0], [1], [0, 0, 1, 1], [], []>} : vector<16x32xf32>, vector<32x32xf32>, vector<16x32xf32> -> vector<16x32xf32>
    %c0_3 = arith.constant 0 : index
    %c0_4 = arith.constant 0 : index
    %3 = vector.load %arg6[%c0_3, %c0_4] : memref<1x32xf32, #tpu.memory_space<vmem>>, vector<1x32xf32>
    %4 = vector.broadcast %3 : vector<1x32xf32> to vector<16x32xf32>
    %5 = arith.addf %2, %4 : vector<16x32xf32>
    %c0_5 = arith.constant 0 : index
    %c0_6 = arith.constant 0 : index
    %6 = vector.load %arg2[%c0_5, %c0_6] : memref<16x32xf32, #tpu.memory_space<vmem>>, vector<16x32xf32>
    %c0_7 = arith.constant 0 : index
    %c0_8 = arith.constant 0 : index
    %7 = vector.load %arg7[%c0_7, %c0_8] : memref<32x32xf32, #tpu.memory_space<vmem>>, vector<32x32xf32>
    %cst_9 = arith.constant dense<0.000000e+00> : vector<16x32xf32>
    %8 = tpu.matmul %6, %7, %cst_9 {dimension_numbers = #tpu.dot_dimension_numbers<[1], [0], [0], [1], [0, 0, 1, 1], [], []>} : vector<16x32xf32>, vector<32x32xf32>, vector<16x32xf32> -> vector<16x32xf32>
    %c0_10 = arith.constant 0 : index
    %c0_11 = arith.constant 0 : index
    %9 = vector.load %arg8[%c0_10, %c0_11] : memref<1x32xf32, #tpu.memory_space<vmem>>, vector<1x32xf32>
    %10 = vector.broadcast %9 : vector<1x32xf32> to vector<16x32xf32>
    %11 = arith.addf %8, %10 : vector<16x32xf32>
    %c0_12 = arith.constant 0 : index
    %c0_13 = arith.constant 0 : index
    %12 = vector.load %arg3[%c0_12, %c0_13] : memref<16x32xf32, #tpu.memory_space<vmem>>, vector<16x32xf32>
    %c0_14 = arith.constant 0 : index
    %c0_15 = arith.constant 0 : index
    %13 = vector.load %arg9[%c0_14, %c0_15] : memref<32x32xf32, #tpu.memory_space<vmem>>, vector<32x32xf32>
    %cst_16 = arith.constant dense<0.000000e+00> : vector<16x32xf32>
    %14 = tpu.matmul %12, %13, %cst_16 {dimension_numbers = #tpu.dot_dimension_numbers<[1], [0], [0], [1], [0, 0, 1, 1], [], []>} : vector<16x32xf32>, vector<32x32xf32>, vector<16x32xf32> -> vector<16x32xf32>
    %c0_17 = arith.constant 0 : index
    %c0_18 = arith.constant 0 : index
    %15 = vector.load %arg10[%c0_17, %c0_18] : memref<1x32xf32, #tpu.memory_space<vmem>>, vector<1x32xf32>
    %16 = vector.broadcast %15 : vector<1x32xf32> to vector<16x32xf32>
    %17 = arith.addf %14, %16 : vector<16x32xf32>
    %18 = vector.extract_strided_slice %17 {offsets = [0, 0], sizes = [16, 8], strides = [1, 1]} : vector<16x32xf32> to vector<16x8xf32>
    %19 = vector.shape_cast %18 : vector<16x8xf32> to vector<2x8x8xf32>
    %20 = vector.extract_strided_slice %17 {offsets = [0, 8], sizes = [16, 8], strides = [1, 1]} : vector<16x32xf32> to vector<16x8xf32>
    %21 = vector.shape_cast %20 : vector<16x8xf32> to vector<2x8x8xf32>
    %22 = vector.extract_strided_slice %17 {offsets = [0, 16], sizes = [16, 8], strides = [1, 1]} : vector<16x32xf32> to vector<16x8xf32>
    %23 = vector.shape_cast %22 : vector<16x8xf32> to vector<2x8x8xf32>
    %24 = vector.extract_strided_slice %17 {offsets = [0, 24], sizes = [16, 8], strides = [1, 1]} : vector<16x32xf32> to vector<16x8xf32>
    %25 = vector.shape_cast %24 : vector<16x8xf32> to vector<2x8x8xf32>
    %26 = tpu.concatenate %19, %21, %23, %25 in 0 : vector<2x8x8xf32>, vector<2x8x8xf32>, vector<2x8x8xf32>, vector<2x8x8xf32> -> vector<8x8x8xf32>
    %27 = vector.extract_strided_slice %11 {offsets = [0, 0], sizes = [16, 8], strides = [1, 1]} : vector<16x32xf32> to vector<16x8xf32>
    %28 = vector.shape_cast %27 : vector<16x8xf32> to vector<2x8x8xf32>
    %29 = vector.extract_strided_slice %11 {offsets = [0, 8], sizes = [16, 8], strides = [1, 1]} : vector<16x32xf32> to vector<16x8xf32>
    %30 = vector.shape_cast %29 : vector<16x8xf32> to vector<2x8x8xf32>
    %31 = vector.extract_strided_slice %11 {offsets = [0, 16], sizes = [16, 8], strides = [1, 1]} : vector<16x32xf32> to vector<16x8xf32>
    %32 = vector.shape_cast %31 : vector<16x8xf32> to vector<2x8x8xf32>
    %33 = vector.extract_strided_slice %11 {offsets = [0, 24], sizes = [16, 8], strides = [1, 1]} : vector<16x32xf32> to vector<16x8xf32>
    %34 = vector.shape_cast %33 : vector<16x8xf32> to vector<2x8x8xf32>
    %35 = tpu.concatenate %28, %30, %32, %34 in 0 : vector<2x8x8xf32>, vector<2x8x8xf32>, vector<2x8x8xf32>, vector<2x8x8xf32> -> vector<8x8x8xf32>
    %36 = vector.extract_strided_slice %5 {offsets = [0, 0], sizes = [16, 8], strides = [1, 1]} : vector<16x32xf32> to vector<16x8xf32>
    %37 = vector.shape_cast %36 : vector<16x8xf32> to vector<2x8x8xf32>
    %38 = vector.extract_strided_slice %5 {offsets = [0, 8], sizes = [16, 8], strides = [1, 1]} : vector<16x32xf32> to vector<16x8xf32>
    %39 = vector.shape_cast %38 : vector<16x8xf32> to vector<2x8x8xf32>
    %40 = vector.extract_strided_slice %5 {offsets = [0, 16], sizes = [16, 8], strides = [1, 1]} : vector<16x32xf32> to vector<16x8xf32>
    %41 = vector.shape_cast %40 : vector<16x8xf32> to vector<2x8x8xf32>
    %42 = vector.extract_strided_slice %5 {offsets = [0, 24], sizes = [16, 8], strides = [1, 1]} : vector<16x32xf32> to vector<16x8xf32>
    %43 = vector.shape_cast %42 : vector<16x8xf32> to vector<2x8x8xf32>
    %44 = tpu.concatenate %37, %39, %41, %43 in 0 : vector<2x8x8xf32>, vector<2x8x8xf32>, vector<2x8x8xf32>, vector<2x8x8xf32> -> vector<8x8x8xf32>
    "tpu.trace_start"() <{level = 10 : i32, message = "bqd,bkd->bqk"}> : () -> ()
    %cst_19 = arith.constant dense<0.000000e+00> : vector<8x8x8xf32>
    %45 = tpu.matmul %26, %35, %cst_19 {dimension_numbers = #tpu.dot_dimension_numbers<[2], [2], [1], [1], [0, 0, 0, 1, 1, 1], [0], [0]>} : vector<8x8x8xf32>, vector<8x8x8xf32>, vector<8x8x8xf32> -> vector<8x8x8xf32>
    "tpu.trace_stop"() : () -> ()
    %46 = vector.shape_cast %45 : vector<8x8x8xf32> to vector<4x2x8x8xf32>
    %c0_20 = arith.constant 0 : index
    %c0_21 = arith.constant 0 : index
    %c0_22 = arith.constant 0 : index
    %47 = vector.load %arg4[%c0_20, %c0_21, %c0_22] : memref<2x1x8xf32, #tpu.memory_space<vmem>>, vector<2x1x8xf32>
    %48 = vector.shape_cast %47 : vector<2x1x8xf32> to vector<1x2x1x8xf32>
    %49 = vector.broadcast %48 : vector<1x2x1x8xf32> to vector<4x2x8x8xf32>
    %50 = arith.addf %46, %49 : vector<4x2x8x8xf32>
    %51 = vector.shape_cast %50 : vector<4x2x8x8xf32> to vector<8x8x8xf32>
    %cst_23 = arith.constant dense<0xFF800000> : vector<8x8xf32>
    %52 = vector.multi_reduction <maximumf>, %51, %cst_23 [2] : vector<8x8x8xf32> to vector<8x8xf32>
    %53 = vector.shape_cast %52 : vector<8x8xf32> to vector<8x8x1xf32>
    %54 = vector.broadcast %53 : vector<8x8x1xf32> to vector<8x8x8xf32>
    %55 = arith.subf %51, %54 : vector<8x8x8xf32>
    %56 = math.exp %55 : vector<8x8x8xf32>
    %cst_24 = arith.constant dense<0.000000e+00> : vector<8x8xf32>
    %57 = vector.multi_reduction <add>, %56, %cst_24 [2] : vector<8x8x8xf32> to vector<8x8xf32>
    %58 = vector.shape_cast %57 : vector<8x8xf32> to vector<8x8x1xf32>
    %59 = tpu.reciprocal %58 {approx = true} : vector<8x8x1xf32> -> vector<8x8x1xf32>
    %60 = vector.broadcast %59 : vector<8x8x1xf32> to vector<8x8x8xf32>
    %61 = arith.mulf %56, %60 : vector<8x8x8xf32>
    "tpu.trace_start"() <{level = 10 : i32, message = "bqk,bkd->bqd"}> : () -> ()
    %cst_25 = arith.constant dense<0.000000e+00> : vector<8x8x8xf32>
    %62 = tpu.matmul %61, %44, %cst_25 {dimension_numbers = #tpu.dot_dimension_numbers<[2], [1], [1], [2], [0, 0, 0, 1, 1, 2], [0], [0]>} : vector<8x8x8xf32>, vector<8x8x8xf32>, vector<8x8x8xf32> -> vector<8x8x8xf32>
    "tpu.trace_stop"() : () -> ()
    %63 = vector.extract_strided_slice %62 {offsets = [0, 0, 0], sizes = [2, 8, 8], strides = [1, 1, 1]} : vector<8x8x8xf32> to vector<2x8x8xf32>
    %64 = vector.shape_cast %63 : vector<2x8x8xf32> to vector<16x8xf32>
    %c0_26 = arith.constant 0 : index
    %c0_27 = arith.constant 0 : index
    %65 = vector.load %arg14[%c0_26, %c0_27] : memref<16x32xf32, #tpu.memory_space<vmem>>, vector<16x8xf32>
    tpu.vector_store %arg14[%c0_26, %c0_27], %64 {strides = array<i32>} : memref<16x32xf32, #tpu.memory_space<vmem>>, vector<16x8xf32>,
    %66 = vector.extract_strided_slice %62 {offsets = [2, 0, 0], sizes = [2, 8, 8], strides = [1, 1, 1]} : vector<8x8x8xf32> to vector<2x8x8xf32>
    %67 = vector.shape_cast %66 : vector<2x8x8xf32> to vector<16x8xf32>
    %c0_28 = arith.constant 0 : index
    %c8 = arith.constant 8 : index
    %68 = vector.load %arg14[%c0_28, %c8] : memref<16x32xf32, #tpu.memory_space<vmem>>, vector<16x8xf32>
    tpu.vector_store %arg14[%c0_28, %c8], %67 {strides = array<i32>} : memref<16x32xf32, #tpu.memory_space<vmem>>, vector<16x8xf32>,
    %69 = vector.extract_strided_slice %62 {offsets = [4, 0, 0], sizes = [2, 8, 8], strides = [1, 1, 1]} : vector<8x8x8xf32> to vector<2x8x8xf32>
    %70 = vector.shape_cast %69 : vector<2x8x8xf32> to vector<16x8xf32>
    %c0_29 = arith.constant 0 : index
    %c16 = arith.constant 16 : index
    %71 = vector.load %arg14[%c0_29, %c16] : memref<16x32xf32, #tpu.memory_space<vmem>>, vector<16x8xf32>
    tpu.vector_store %arg14[%c0_29, %c16], %70 {strides = array<i32>} : memref<16x32xf32, #tpu.memory_space<vmem>>, vector<16x8xf32>,
    %72 = vector.extract_strided_slice %62 {offsets = [6, 0, 0], sizes = [2, 8, 8], strides = [1, 1, 1]} : vector<8x8x8xf32> to vector<2x8x8xf32>
    %73 = vector.shape_cast %72 : vector<2x8x8xf32> to vector<16x8xf32>
    %c0_30 = arith.constant 0 : index
    %c24 = arith.constant 24 : index
    %74 = vector.load %arg14[%c0_30, %c24] : memref<16x32xf32, #tpu.memory_space<vmem>>, vector<16x8xf32>
    tpu.vector_store %arg14[%c0_30, %c24], %73 {strides = array<i32>} : memref<16x32xf32, #tpu.memory_space<vmem>>, vector<16x8xf32>,
    %c0_31 = arith.constant 0 : index
    %c0_32 = arith.constant 0 : index
    %75 = vector.load %arg14[%c0_31, %c0_32] : memref<16x32xf32, #tpu.memory_space<vmem>>, vector<16x32xf32>
    %c0_33 = arith.constant 0 : index
    %c0_34 = arith.constant 0 : index
    %76 = vector.load %arg11[%c0_33, %c0_34] : memref<32x32xf32, #tpu.memory_space<vmem>>, vector<32x32xf32>
    %cst_35 = arith.constant dense<0.000000e+00> : vector<16x32xf32>
    %77 = tpu.matmul %75, %76, %cst_35 {dimension_numbers = #tpu.dot_dimension_numbers<[1], [0], [0], [1], [0, 0, 1, 1], [], []>} : vector<16x32xf32>, vector<32x32xf32>, vector<16x32xf32> -> vector<16x32xf32>
    %c0_36 = arith.constant 0 : index
    %c0_37 = arith.constant 0 : index
    %78 = vector.load %arg12[%c0_36, %c0_37] : memref<1x32xf32, #tpu.memory_space<vmem>>, vector<1x32xf32>
    %79 = vector.broadcast %78 : vector<1x32xf32> to vector<16x32xf32>
    %80 = arith.addf %77, %79 : vector<16x32xf32>
    %c0_38 = arith.constant 0 : index
    %c0_39 = arith.constant 0 : index
    %81 = vector.load %arg13[%c0_38, %c0_39] : memref<16x32xf32, #tpu.memory_space<vmem>>, vector<16x32xf32>
    tpu.vector_store %arg13[%c0_38, %c0_39], %80 {strides = array<i32>} : memref<16x32xf32, #tpu.memory_space<vmem>>, vector<16x32xf32>,
    return
  }
  func.func @transform_0(%arg0: i32) -> (i32, i32) {
    %c0_i32 = arith.constant 0 : i32
    %c0_i32_0 = arith.constant 0 : i32
    return %arg0, %c0_i32 : i32, i32
  }
  func.func @transform_1(%arg0: i32) -> (i32, i32) {
    %c0_i32 = arith.constant 0 : i32
    %c0_i32_0 = arith.constant 0 : i32
    return %arg0, %c0_i32 : i32, i32
  }
  func.func @transform_2(%arg0: i32) -> (i32, i32) {
    %c0_i32 = arith.constant 0 : i32
    %c0_i32_0 = arith.constant 0 : i32
    return %arg0, %c0_i32 : i32, i32
  }
  func.func @transform_3(%arg0: i32) -> (i32, i32, i32) {
    %c0_i32 = arith.constant 0 : i32
    %c0_i32_0 = arith.constant 0 : i32
    %c0_i32_1 = arith.constant 0 : i32
    return %arg0, %c0_i32, %c0_i32_0 : i32, i32, i32
  }
  func.func @transform_4(%arg0: i32) -> (i32, i32) {
    %c0_i32 = arith.constant 0 : i32
    %c0_i32_0 = arith.constant 0 : i32
    %c0_i32_1 = arith.constant 0 : i32
    return %c0_i32, %c0_i32_0 : i32, i32
  }
  func.func @transform_5(%arg0: i32) -> (i32, i32) {
    %c0_i32 = arith.constant 0 : i32
    %c0_i32_0 = arith.constant 0 : i32
    %c0_i32_1 = arith.constant 0 : i32
    return %c0_i32, %c0_i32_0 : i32, i32
  }
  func.func @transform_6(%arg0: i32) -> (i32, i32) {
    %c0_i32 = arith.constant 0 : i32
    %c0_i32_0 = arith.constant 0 : i32
    %c0_i32_1 = arith.constant 0 : i32
    return %c0_i32, %c0_i32_0 : i32, i32
  }
  func.func @transform_7(%arg0: i32) -> (i32, i32) {
    %c0_i32 = arith.constant 0 : i32
    %c0_i32_0 = arith.constant 0 : i32
    %c0_i32_1 = arith.constant 0 : i32
    return %c0_i32, %c0_i32_0 : i32, i32
  }
  func.func @transform_8(%arg0: i32) -> (i32, i32) {
    %c0_i32 = arith.constant 0 : i32
    %c0_i32_0 = arith.constant 0 : i32
    %c0_i32_1 = arith.constant 0 : i32
    return %c0_i32, %c0_i32_0 : i32, i32
  }
  func.func @transform_9(%arg0: i32) -> (i32, i32) {
    %c0_i32 = arith.constant 0 : i32
    %c0_i32_0 = arith.constant 0 : i32
    %c0_i32_1 = arith.constant 0 : i32
    return %c0_i32, %c0_i32_0 : i32, i32
  }
  func.func @transform_10(%arg0: i32) -> (i32, i32) {
    %c0_i32 = arith.constant 0 : i32
    %c0_i32_0 = arith.constant 0 : i32
    %c0_i32_1 = arith.constant 0 : i32
    return %c0_i32, %c0_i32_0 : i32, i32
  }
  func.func @transform_11(%arg0: i32) -> (i32, i32) {
    %c0_i32 = arith.constant 0 : i32
    %c0_i32_0 = arith.constant 0 : i32
    %c0_i32_1 = arith.constant 0 : i32
    return %c0_i32, %c0_i32_0 : i32, i32
  }
  func.func @transform_12(%arg0: i32) -> (i32, i32) {
    %c0_i32 = arith.constant 0 : i32
    %c0_i32_0 = arith.constant 0 : i32
    return %arg0, %c0_i32 : i32, i32
  }
}

</mosaic_0001>

<llo_original>
// kernel: tpu_custom_call.1
$region0: #{tpu_custom_call.1}
  #allocation0 [shape = 'u32[]', space=smem, size = 0x4, offset = 0x4, fixed_abs, tag = 'smem constant byte address 0x4 - core index']
  #allocation1 [shape = 'u32[72,128]{1,0:T(1,128)}', space=vmem, size = 0x9000, scoped, tag = 'internal scratch']
  #allocation2 [shape = 'f32[16,32]{1,0:T(8,128)}', space=vmem, size = 0x2000, scoped, tag = 'scratch operand']
  %s0 = inlined_call_operand.hbm [shape: f32[16,32], index: 0, kind: input, shape index: {}]
  %s1 = inlined_call_operand.hbm [shape: f32[16,32], index: 1, kind: input, shape index: {}]
  %s2 = inlined_call_operand.hbm [shape: f32[16,32], index: 2, kind: input, shape index: {}]
  %s3 = inlined_call_operand.vmem [shape: f32[2,1,8], index: 3, kind: input, shape index: {}]
  %s4 = inlined_call_operand.hbm [shape: f32[32,32], index: 4, kind: input, shape index: {}]
  %s5 = inlined_call_operand.vmem [shape: f32[1,32], index: 5, kind: input, shape index: {}]
  %s6 = inlined_call_operand.hbm [shape: f32[32,32], index: 6, kind: input, shape index: {}]
  %s7 = inlined_call_operand.vmem [shape: f32[1,32], index: 7, kind: input, shape index: {}]
  %s8 = inlined_call_operand.hbm [shape: f32[32,32], index: 8, kind: input, shape index: {}]
  %s9 = inlined_call_operand.vmem [shape: f32[1,32], index: 9, kind: input, shape index: {}]
  %s10 = inlined_call_operand.hbm [shape: f32[32,32], index: 10, kind: input, shape index: {}]
  %s11 = inlined_call_operand.vmem [shape: f32[1,32], index: 11, kind: input, shape index: {}]
  %s12 = inlined_call_operand.hbm [shape: f32[16,32], index: 12, kind: output, shape index: {}]
  %s13 = sld [smem:[#allocation0]]
  $region86: #{tpu_custom_call.1} parent=0
    _
  %s15 = ssub.s32 1, %s13
  %s16 = scalar_select 0, %s15, %s13
  $region1: #{tpu_custom_call.1} parent=0
    #allocation3 [shape = 'u8[8192]{0}', space=vmem, size = 0x2000, scoped, tag = 'input window, operand 0, single buffered']
    #allocation4 [shape = 's32[1]{0}', space=sflag, size = 0x4, scoped, tag = 'scoped memory for tpu_custom_call.1']
    #allocation5 [shape = 's32[1]{0}', space=sflag, size = 0x4, scoped, tag = 'scoped memory for tpu_custom_call.1']
    #allocation6 [shape = 'u8[8192]{0}', space=vmem, size = 0x2000, scoped, tag = 'input window, operand 1, single buffered']
    #allocation7 [shape = 's32[1]{0}', space=sflag, size = 0x4, scoped, tag = 'scoped memory for tpu_custom_call.1']
    #allocation8 [shape = 'u8[8192]{0}', space=vmem, size = 0x2000, scoped, tag = 'input window, operand 2, single buffered']
    #allocation9 [shape = 'u8[16384]{0}', space=vmem, size = 0x4000, scoped, tag = 'input window, operand 4, single buffered']
    #allocation10 [shape = 's32[1]{0}', space=sflag, size = 0x4, scoped, tag = 'scoped memory for tpu_custom_call.1']
    #allocation11 [shape = 'u8[16384]{0}', space=vmem, size = 0x4000, scoped, tag = 'input window, operand 6, single buffered']
    #allocation12 [shape = 'u8[16384]{0}', space=vmem, size = 0x4000, scoped, tag = 'input window, operand 8, single buffered']
    #allocation13 [shape = 's32[1]{0}', space=sflag, size = 0x4, scoped, tag = 'scoped memory for tpu_custom_call.1']
    #allocation14 [shape = 'u8[16384]{0}', space=vmem, size = 0x4000, scoped, tag = 'input window, operand 10, single buffered']
    #allocation15 [shape = 'u8[8192]{0}', space=vmem, size = 0x2000, scoped, tag = 'output window, operand 0, single buffered']
    %17 = vsyncpa [#allocation4], 0
    %18 = vsyncpa [#allocation7], 0
    %19 = vsyncpa [#allocation10], 0
    %20 = vsyncpa [#allocation13], 0
    %21 = vsyncpa [#allocation5], 0
    // Predicated region
    $region2: #{tpu_custom_call.1} parent=1 // pred_check
      _
    $region3: #{tpu_custom_call.1} parent=1 // pred_check_branch
      %23 = sbr.rel (0) target = $region5
    $region4: #{tpu_custom_call.1} parent=1 // pred_region
      %25 = vsyncadd [#allocation4], 0
      %s26 = sshll.u32 %s0, 4
      %s27 = int_to_ptr.hbm [resolvable:$true] %s26
      %s28 = sshll.u32 [#allocation3], 4
      %s29 = int_to_ptr.vmem [resolvable:$true] %s28
      %34 = dma.hbm_to_vmem [thread:$0]  %s27, 256, %s29, [#allocation4], 128, 128, 8
    $region5: #{tpu_custom_call.1} parent=1 // pred_fallthru
      _
    // Predicated region
    $region6: #{tpu_custom_call.1} parent=1 // pred_check
      _
    $region7: #{tpu_custom_call.1} parent=1 // pred_check_branch
      %36 = sbr.rel (0) target = $region9
    $region8: #{tpu_custom_call.1} parent=1 // pred_region
      %38 = vsyncadd [#allocation7], 0
      %s39 = sshll.u32 %s1, 4
      %s40 = int_to_ptr.hbm [resolvable:$true] %s39
      %s41 = sshll.u32 [#allocation6], 4
      %s42 = int_to_ptr.vmem [resolvable:$true] %s41
      %47 = dma.hbm_to_vmem [thread:$0]  %s40, 256, %s42, [#allocation7], 128, 128, 8
    $region9: #{tpu_custom_call.1} parent=1 // pred_fallthru
      _
    // Predicated region
    $region10: #{tpu_custom_call.1} parent=1 // pred_check
      _
    $region11: #{tpu_custom_call.1} parent=1 // pred_check_branch
      %49 = sbr.rel (0) target = $region13
    $region12: #{tpu_custom_call.1} parent=1 // pred_region
      %51 = vsyncadd [#allocation7], 0
      %s52 = sshll.u32 %s2, 4
      %s53 = int_to_ptr.hbm [resolvable:$true] %s52
      %s54 = sshll.u32 [#allocation8], 4
      %s55 = int_to_ptr.vmem [resolvable:$true] %s54
      %60 = dma.hbm_to_vmem [thread:$0]  %s53, 256, %s55, [#allocation7], 128, 128, 8
    $region13: #{tpu_custom_call.1} parent=1 // pred_fallthru
      _
    // Predicated region
    $region14: #{tpu_custom_call.1} parent=1 // pred_check
      _
    $region15: #{tpu_custom_call.1} parent=1 // pred_check_branch
      %62 = sbr.rel (0) target = $region17
    $region16: #{tpu_custom_call.1} parent=1 // pred_region
      _
    $region17: #{tpu_custom_call.1} parent=1 // pred_fallthru
      _
    // Predicated region
    $region18: #{tpu_custom_call.1} parent=1 // pred_check
      _
    $region19: #{tpu_custom_call.1} parent=1 // pred_check_branch
      %64 = sbr.rel (0) target = $region21
    $region20: #{tpu_custom_call.1} parent=1 // pred_region
      %66 = vsyncadd [#allocation10], 0
      %s67 = sshll.u32 %s4, 4
      %s68 = int_to_ptr.hbm [resolvable:$true] %s67
      %s69 = sshll.u32 [#allocation9], 4
      %s70 = int_to_ptr.vmem [resolvable:$true] %s69
      %75 = dma.hbm_to_vmem [thread:$0]  %s68, 512, %s70, [#allocation10], 128, 128, 8
    $region21: #{tpu_custom_call.1} parent=1 // pred_fallthru
      _
    // Predicated region
    $region22: #{tpu_custom_call.1} parent=1 // pred_check
      _
    $region23: #{tpu_custom_call.1} parent=1 // pred_check_branch
      %77 = sbr.rel (0) target = $region25
    $region24: #{tpu_custom_call.1} parent=1 // pred_region
      _
    $region25: #{tpu_custom_call.1} parent=1 // pred_fallthru
      _
    // Predicated region
    $region26: #{tpu_custom_call.1} parent=1 // pred_check
      _
    $region27: #{tpu_custom_call.1} parent=1 // pred_check_branch
      %79 = sbr.rel (0) target = $region29
    $region28: #{tpu_custom_call.1} parent=1 // pred_region
      %81 = vsyncadd [#allocation10], 0
      %s82 = sshll.u32 %s6, 4
      %s83 = int_to_ptr.hbm [resolvable:$true] %s82
      %s84 = sshll.u32 [#allocation11], 4
      %s85 = int_to_ptr.vmem [resolvable:$true] %s84
      %90 = dma.hbm_to_vmem [thread:$0]  %s83, 512, %s85, [#allocation10], 128, 128, 8
    $region29: #{tpu_custom_call.1} parent=1 // pred_fallthru
      _
    // Predicated region
    $region30: #{tpu_custom_call.1} parent=1 // pred_check
      _
    $region31: #{tpu_custom_call.1} parent=1 // pred_check_branch
      %92 = sbr.rel (0) target = $region33
    $region32: #{tpu_custom_call.1} parent=1 // pred_region
      _
    $region33: #{tpu_custom_call.1} parent=1 // pred_fallthru
      _
    // Predicated region
    $region34: #{tpu_custom_call.1} parent=1 // pred_check
      _
    $region35: #{tpu_custom_call.1} parent=1 // pred_check_branch
      %94 = sbr.rel (0) target = $region37
    $region36: #{tpu_custom_call.1} parent=1 // pred_region
      %96 = vsyncadd [#allocation13], 0
      %s97 = sshll.u32 %s8, 4
      %s98 = int_to_ptr.hbm [resolvable:$true] %s97
      %s99 = sshll.u32 [#allocation12], 4
      %s100 = int_to_ptr.vmem [resolvable:$true] %s99
      %105 = dma.hbm_to_vmem [thread:$0]  %s98, 512, %s100, [#allocation13], 128, 128, 8
    $region37: #{tpu_custom_call.1} parent=1 // pred_fallthru
      _
    // Predicated region
    $region38: #{tpu_custom_call.1} parent=1 // pred_check
      _
    $region39: #{tpu_custom_call.1} parent=1 // pred_check_branch
      %107 = sbr.rel (0) target = $region41
    $region40: #{tpu_custom_call.1} parent=1 // pred_region
      _
    $region41: #{tpu_custom_call.1} parent=1 // pred_fallthru
      _
    // Predicated region
    $region42: #{tpu_custom_call.1} parent=1 // pred_check
      _
    $region43: #{tpu_custom_call.1} parent=1 // pred_check_branch
      %109 = sbr.rel (0) target = $region45
    $region44: #{tpu_custom_call.1} parent=1 // pred_region
      %111 = vsyncadd [#allocation13], 0
      %s112 = sshll.u32 %s10, 4
      %s113 = int_to_ptr.hbm [resolvable:$true] %s112
      %s114 = sshll.u32 [#allocation14], 4
      %s115 = int_to_ptr.vmem [resolvable:$true] %s114
      %120 = dma.hbm_to_vmem [thread:$0]  %s113, 512, %s115, [#allocation13], 128, 128, 8
    $region45: #{tpu_custom_call.1} parent=1 // pred_fallthru
      _
    // Predicated region
    $region46: #{tpu_custom_call.1} parent=1 // pred_check
      _
    $region47: #{tpu_custom_call.1} parent=1 // pred_check_branch
      %122 = sbr.rel (0) target = $region49
    $region48: #{tpu_custom_call.1} parent=1 // pred_region
      _
    $region49: #{tpu_custom_call.1} parent=1 // pred_fallthru
      _
    // Predicated region
    $region50: #{tpu_custom_call.1} parent=1 // pred_check
      _
    $region51: #{tpu_custom_call.1} parent=1 // pred_check_branch
      %124 = sbr.rel (0) target = $region53
    $region52: #{tpu_custom_call.1} parent=1 // pred_region
      %126 = dma.done [#allocation4], 256
    $region53: #{tpu_custom_call.1} parent=1 // pred_fallthru
      _
    // Predicated region
    $region54: #{tpu_custom_call.1} parent=1 // pred_check
      _
    $region55: #{tpu_custom_call.1} parent=1 // pred_check_branch
      %128 = sbr.rel (0) target = $region57
    $region56: #{tpu_custom_call.1} parent=1 // pred_region
      %130 = dma.done [#allocation7], 256
    $region57: #{tpu_custom_call.1} parent=1 // pred_fallthru
      _
    // Predicated region
    $region58: #{tpu_custom_call.1} parent=1 // pred_check
      _
    $region59: #{tpu_custom_call.1} parent=1 // pred_check_branch
      %132 = sbr.rel (0) target = $region61
    $region60: #{tpu_custom_call.1} parent=1 // pred_region
      %134 = dma.done [#allocation7], 256
    $region61: #{tpu_custom_call.1} parent=1 // pred_fallthru
      _
    // Predicated region
    $region62: #{tpu_custom_call.1} parent=1 // pred_check
      _
    $region63: #{tpu_custom_call.1} parent=1 // pred_check_branch
      %136 = sbr.rel (0) target = $region65
    $region64: #{tpu_custom_call.1} parent=1 // pred_region
      %138 = dma.done [#allocation10], 512
    $region65: #{tpu_custom_call.1} parent=1 // pred_fallthru
      _
    // Predicated region
    $region66: #{tpu_custom_call.1} parent=1 // pred_check
      _
    $region67: #{tpu_custom_call.1} parent=1 // pred_check_branch
      %140 = sbr.rel (0) target = $region69
    $region68: #{tpu_custom_call.1} parent=1 // pred_region
      %142 = dma.done [#allocation10], 512
    $region69: #{tpu_custom_call.1} parent=1 // pred_fallthru
      _
    // Predicated region
    $region70: #{tpu_custom_call.1} parent=1 // pred_check
      _
    $region71: #{tpu_custom_call.1} parent=1 // pred_check_branch
      %144 = sbr.rel (0) target = $region73
    $region72: #{tpu_custom_call.1} parent=1 // pred_region
      %146 = dma.done [#allocation13], 512
    $region73: #{tpu_custom_call.1} parent=1 // pred_fallthru
      _
    // Predicated region
    $region74: #{tpu_custom_call.1} parent=1 // pred_check
      _
    $region75: #{tpu_custom_call.1} parent=1 // pred_check_branch
      %148 = sbr.rel (0) target = $region77
    $region76: #{tpu_custom_call.1} parent=1 // pred_region
      %150 = dma.done [#allocation13], 512
    $region77: #{tpu_custom_call.1} parent=1 // pred_fallthru
      _
    %v151 = vld [vmem:[#allocation3] sm:$0xff]
    %v152 = vld [vmem:[#allocation3 + $0x8] sm:$0xff]
    %v153 = vld [vmem:[#allocation9] sm:$0xff]
    %v154 = vld [vmem:[#allocation9 + $0x8] sm:$0xff]
    %v155 = vld [vmem:[#allocation9 + $0x10] sm:$0xff]
    %v156 = vld [vmem:[#allocation9 + $0x18] sm:$0xff]
    %v157 = vld [vmem:[%s5] sm:$0x1]
    %v159 = vperm.slane %v157, 0
    %vm161 = vcmask 261120
    %v163 = vsel %vm161, %v151, 0
    %v166 = vsel %vm161, %v152, 0
    %168 = vmatpush.msra.mxu0 0.0
    %169 = vmatpush.msra.mxu0 0.0
    %170 = vmatpush.msra.mxu0 0.0
    %171 = vmatpush.msra.mxu0 0.0
    %172 = vmatpush.msra.mxu0 0.0
    %173 = vmatpush.msra.mxu0 0.0
    %174 = vmatpush.msra.mxu0 0.0
    %175 = vmatpush.msra.mxu0 0.0
    %176 = vmatpush.msra.mxu0 0.0
    %177 = vmatpush.msra.mxu0 0.0
    %178 = vmatpush.msra.mxu0 0.0
    %179 = vmatpush.msra.mxu0 0.0
    %180 = vmatpush.msra.mxu0 %v156
    %181 = vmatpush.msra.mxu0 %v155
    %182 = vmatpush.msra.mxu0 %v154
    %183 = vmatpush.msra.mxu0 %v153
    %184 = vmatmul.f32.gmra.mxu0 %v163
    %v185 = vpop.f32.mrf.mxu0
    %v186 = vadd.f32 %v159, %v185
    %187 = vmatmul.f32.gmra.mxu0 %v166
    %v188 = vpop.f32.mrf.mxu0
    %v189 = vadd.f32 %v159, %v188
    %190 = vdwg.mxu0
    %v191 = vld [vmem:[#allocation6] sm:$0xff]
    %v192 = vld [vmem:[#allocation6 + $0x8] sm:$0xff]
    %v193 = vld [vmem:[#allocation11] sm:$0xff]
    %v194 = vld [vmem:[#allocation11 + $0x8] sm:$0xff]
    %v195 = vld [vmem:[#allocation11 + $0x10] sm:$0xff]
    %v196 = vld [vmem:[#allocation11 + $0x18] sm:$0xff]
    %v197 = vld [vmem:[%s7] sm:$0x1]
    %v199 = vperm.slane %v197, 0
    %v202 = vsel %vm161, %v191, 0
    %v205 = vsel %vm161, %v192, 0
    %207 = vmatpush.msra.mxu0 0.0
    %208 = vmatpush.msra.mxu0 0.0
    %209 = vmatpush.msra.mxu0 0.0
    %210 = vmatpush.msra.mxu0 0.0
    %211 = vmatpush.msra.mxu0 0.0
    %212 = vmatpush.msra.mxu0 0.0
    %213 = vmatpush.msra.mxu0 0.0
    %214 = vmatpush.msra.mxu0 0.0
    %215 = vmatpush.msra.mxu0 0.0
    %216 = vmatpush.msra.mxu0 0.0
    %217 = vmatpush.msra.mxu0 0.0
    %218 = vmatpush.msra.mxu0 0.0
    %219 = vmatpush.msra.mxu0 %v196
    %220 = vmatpush.msra.mxu0 %v195
    %221 = vmatpush.msra.mxu0 %v194
    %222 = vmatpush.msra.mxu0 %v193
    %223 = vmatmul.f32.gmra.mxu0 %v202
    %v224 = vpop.f32.mrf.mxu0
    %v225 = vadd.f32 %v199, %v224
    %226 = vmatmul.f32.gmra.mxu0 %v205
    %v227 = vpop.f32.mrf.mxu0
    %v228 = vadd.f32 %v199, %v227
    %229 = vdwg.mxu0
    %v230 = vld [vmem:[#allocation8] sm:$0xff]
    %v231 = vld [vmem:[#allocation8 + $0x8] sm:$0xff]
    %v232 = vld [vmem:[#allocation12] sm:$0xff]
    %v233 = vld [vmem:[#allocation12 + $0x8] sm:$0xff]
    %v234 = vld [vmem:[#allocation12 + $0x10] sm:$0xff]
    %v235 = vld [vmem:[#allocation12 + $0x18] sm:$0xff]
    %v236 = vld [vmem:[%s9] sm:$0x1]
    %v238 = vperm.slane %v236, 0
    %v241 = vsel %vm161, %v230, 0
    %v244 = vsel %vm161, %v231, 0
    %246 = vmatpush.msra.mxu0 0.0
    %247 = vmatpush.msra.mxu0 0.0
    %248 = vmatpush.msra.mxu0 0.0
    %249 = vmatpush.msra.mxu0 0.0
    %250 = vmatpush.msra.mxu0 0.0
    %251 = vmatpush.msra.mxu0 0.0
    %252 = vmatpush.msra.mxu0 0.0
    %253 = vmatpush.msra.mxu0 0.0
    %254 = vmatpush.msra.mxu0 0.0
    %255 = vmatpush.msra.mxu0 0.0
    %256 = vmatpush.msra.mxu0 0.0
    %257 = vmatpush.msra.mxu0 0.0
    %258 = vmatpush.msra.mxu0 %v235
    %259 = vmatpush.msra.mxu0 %v234
    %260 = vmatpush.msra.mxu0 %v233
    %261 = vmatpush.msra.mxu0 %v232
    %262 = vmatmul.f32.gmra.mxu0 %v241
    %v263 = vpop.f32.mrf.mxu0
    %v264 = vadd.f32 %v238, %v263
    %265 = vmatmul.f32.gmra.mxu0 %v244
    %v266 = vpop.f32.mrf.mxu0
    %v267 = vadd.f32 %v238, %v266
    %268 = vdwg.mxu0
    %271 = vrot.lane.b32.xlu0 %v264, 120
    %v272 = vpop.permute.xlu0 %271
    %273 = vrot.lane.b32.xlu0 %v267, 120
    %v274 = vpop.permute.xlu0 %273
    %275 = vrot.lane.b32.xlu0 %v264, 112
    %v276 = vpop.permute.xlu0 %275
    %277 = vrot.lane.b32.xlu0 %v267, 112
    %v278 = vpop.permute.xlu0 %277
    %279 = vrot.lane.b32.xlu0 %v264, 104
    %v280 = vpop.permute.xlu0 %279
    %281 = vrot.lane.b32.xlu0 %v267, 104
    %v282 = vpop.permute.xlu0 %281
    %285 = vrot.lane.b32.xlu0 %v225, 120
    %v286 = vpop.permute.xlu0 %285
    %287 = vrot.lane.b32.xlu0 %v228, 120
    %v288 = vpop.permute.xlu0 %287
    %289 = vrot.lane.b32.xlu0 %v225, 112
    %v290 = vpop.permute.xlu0 %289
    %291 = vrot.lane.b32.xlu0 %v228, 112
    %v292 = vpop.permute.xlu0 %291
    %293 = vrot.lane.b32.xlu0 %v225, 104
    %v294 = vpop.permute.xlu0 %293
    %295 = vrot.lane.b32.xlu0 %v228, 104
    %v296 = vpop.permute.xlu0 %295
    %299 = vrot.lane.b32.xlu0 %v186, 120
    %v300 = vpop.permute.xlu0 %299
    %301 = vrot.lane.b32.xlu0 %v189, 120
    %v302 = vpop.permute.xlu0 %301
    %305 = vrot.lane.b32.xlu0 %v186, 112
    %v306 = vpop.permute.xlu0 %305
    %307 = vrot.lane.b32.xlu0 %v189, 112
    %v308 = vpop.permute.xlu0 %307
    %311 = vrot.lane.b32.xlu0 %v186, 104
    %v312 = vpop.permute.xlu0 %311
    %313 = vrot.lane.b32.xlu0 %v189, 104
    %v314 = vpop.permute.xlu0 %313
    %vm317 = vcmask 64512
    %v318 = vsel %vm317, %v264, 0
    %v320 = vsel %vm317, %v225, 0
    %322 = vmatpush.xpose.msra.mxu0 0.0
    %323 = vmatpush.xpose.msra.mxu0 0.0
    %324 = vmatpush.xpose.msra.mxu0 0.0
    %325 = vmatpush.xpose.msra.mxu0 0.0
    %326 = vmatpush.xpose.msra.mxu0 0.0
    %327 = vmatpush.xpose.msra.mxu0 0.0
    %328 = vmatpush.xpose.msra.mxu0 0.0
    %329 = vmatpush.xpose.msra.mxu0 0.0
    %330 = vmatpush.xpose.msra.mxu0 0.0
    %331 = vmatpush.xpose.msra.mxu0 0.0
    %332 = vmatpush.xpose.msra.mxu0 0.0
    %333 = vmatpush.xpose.msra.mxu0 0.0
    %334 = vmatpush.xpose.msra.mxu0 0.0
    %335 = vmatpush.xpose.msra.mxu0 0.0
    %336 = vmatpush.xpose.msra.mxu0 0.0
    %337 = vmatpush.xpose.msra.mxu0 %v320
    %338 = vmatmul.f32.gmra.mxu0 %v318
    %v339 = vpop.f32.mrf.mxu0
    %v340 = vadd.f32 0.0, %v339
    %341 = vdwg.mxu0
    %v342 = vsel %vm317, %v267, 0
    %v344 = vsel %vm317, %v228, 0
    %346 = vmatpush.xpose.msra.mxu0 0.0
    %347 = vmatpush.xpose.msra.mxu0 0.0
    %348 = vmatpush.xpose.msra.mxu0 0.0
    %349 = vmatpush.xpose.msra.mxu0 0.0
    %350 = vmatpush.xpose.msra.mxu0 0.0
    %351 = vmatpush.xpose.msra.mxu0 0.0
    %352 = vmatpush.xpose.msra.mxu0 0.0
    %353 = vmatpush.xpose.msra.mxu0 0.0
    %354 = vmatpush.xpose.msra.mxu0 0.0
    %355 = vmatpush.xpose.msra.mxu0 0.0
    %356 = vmatpush.xpose.msra.mxu0 0.0
    %357 = vmatpush.xpose.msra.mxu0 0.0
    %358 = vmatpush.xpose.msra.mxu0 0.0
    %359 = vmatpush.xpose.msra.mxu0 0.0
    %360 = vmatpush.xpose.msra.mxu0 0.0
    %361 = vmatpush.xpose.msra.mxu0 %v344
    %362 = vmatmul.f32.gmra.mxu0 %v342
    %v363 = vpop.f32.mrf.mxu0
    %v364 = vadd.f32 0.0, %v363
    %365 = vdwg.mxu0
    %v366 = vsel %vm317, %v272, 0
    %v368 = vsel %vm317, %v286, 0
    %370 = vmatpush.xpose.msra.mxu0 0.0
    %371 = vmatpush.xpose.msra.mxu0 0.0
    %372 = vmatpush.xpose.msra.mxu0 0.0
    %373 = vmatpush.xpose.msra.mxu0 0.0
    %374 = vmatpush.xpose.msra.mxu0 0.0
    %375 = vmatpush.xpose.msra.mxu0 0.0
    %376 = vmatpush.xpose.msra.mxu0 0.0
    %377 = vmatpush.xpose.msra.mxu0 0.0
    %378 = vmatpush.xpose.msra.mxu0 0.0
    %379 = vmatpush.xpose.msra.mxu0 0.0
    %380 = vmatpush.xpose.msra.mxu0 0.0
    %381 = vmatpush.xpose.msra.mxu0 0.0
    %382 = vmatpush.xpose.msra.mxu0 0.0
    %383 = vmatpush.xpose.msra.mxu0 0.0
    %384 = vmatpush.xpose.msra.mxu0 0.0
    %385 = vmatpush.xpose.msra.mxu0 %v368
    %386 = vmatmul.f32.gmra.mxu0 %v366
    %v387 = vpop.f32.mrf.mxu0
    %v388 = vadd.f32 0.0, %v387
    %389 = vdwg.mxu0
    %v390 = vsel %vm317, %v274, 0
    %v392 = vsel %vm317, %v288, 0
    %394 = vmatpush.xpose.msra.mxu0 0.0
    %395 = vmatpush.xpose.msra.mxu0 0.0
    %396 = vmatpush.xpose.msra.mxu0 0.0
    %397 = vmatpush.xpose.msra.mxu0 0.0
    %398 = vmatpush.xpose.msra.mxu0 0.0
    %399 = vmatpush.xpose.msra.mxu0 0.0
    %400 = vmatpush.xpose.msra.mxu0 0.0
    %401 = vmatpush.xpose.msra.mxu0 0.0
    %402 = vmatpush.xpose.msra.mxu0 0.0
    %403 = vmatpush.xpose.msra.mxu0 0.0
    %404 = vmatpush.xpose.msra.mxu0 0.0
    %405 = vmatpush.xpose.msra.mxu0 0.0
    %406 = vmatpush.xpose.msra.mxu0 0.0
    %407 = vmatpush.xpose.msra.mxu0 0.0
    %408 = vmatpush.xpose.msra.mxu0 0.0
    %409 = vmatpush.xpose.msra.mxu0 %v392
    %410 = vmatmul.f32.gmra.mxu0 %v390
    %v411 = vpop.f32.mrf.mxu0
    %v412 = vadd.f32 0.0, %v411
    %413 = vdwg.mxu0
    %v414 = vsel %vm317, %v276, 0
    %v416 = vsel %vm317, %v290, 0
    %418 = vmatpush.xpose.msra.mxu0 0.0
    %419 = vmatpush.xpose.msra.mxu0 0.0
    %420 = vmatpush.xpose.msra.mxu0 0.0
    %421 = vmatpush.xpose.msra.mxu0 0.0
    %422 = vmatpush.xpose.msra.mxu0 0.0
    %423 = vmatpush.xpose.msra.mxu0 0.0
    %424 = vmatpush.xpose.msra.mxu0 0.0
    %425 = vmatpush.xpose.msra.mxu0 0.0
    %426 = vmatpush.xpose.msra.mxu0 0.0
    %427 = vmatpush.xpose.msra.mxu0 0.0
    %428 = vmatpush.xpose.msra.mxu0 0.0
    %429 = vmatpush.xpose.msra.mxu0 0.0
    %430 = vmatpush.xpose.msra.mxu0 0.0
    %431 = vmatpush.xpose.msra.mxu0 0.0
    %432 = vmatpush.xpose.msra.mxu0 0.0
    %433 = vmatpush.xpose.msra.mxu0 %v416
    %434 = vmatmul.f32.gmra.mxu0 %v414
    %v435 = vpop.f32.mrf.mxu0
    %v436 = vadd.f32 0.0, %v435
    %437 = vdwg.mxu0
    %v438 = vsel %vm317, %v278, 0
    %v440 = vsel %vm317, %v292, 0
    %442 = vmatpush.xpose.msra.mxu0 0.0
    %443 = vmatpush.xpose.msra.mxu0 0.0
    %444 = vmatpush.xpose.msra.mxu0 0.0
    %445 = vmatpush.xpose.msra.mxu0 0.0
    %446 = vmatpush.xpose.msra.mxu0 0.0
    %447 = vmatpush.xpose.msra.mxu0 0.0
    %448 = vmatpush.xpose.msra.mxu0 0.0
    %449 = vmatpush.xpose.msra.mxu0 0.0
    %450 = vmatpush.xpose.msra.mxu0 0.0
    %451 = vmatpush.xpose.msra.mxu0 0.0
    %452 = vmatpush.xpose.msra.mxu0 0.0
    %453 = vmatpush.xpose.msra.mxu0 0.0
    %454 = vmatpush.xpose.msra.mxu0 0.0
    %455 = vmatpush.xpose.msra.mxu0 0.0
    %456 = vmatpush.xpose.msra.mxu0 0.0
    %457 = vmatpush.xpose.msra.mxu0 %v440
    %458 = vmatmul.f32.gmra.mxu0 %v438
    %v459 = vpop.f32.mrf.mxu0
    %v460 = vadd.f32 0.0, %v459
    %461 = vdwg.mxu0
    %v462 = vsel %vm317, %v280, 0
    %v464 = vsel %vm317, %v294, 0
    %466 = vmatpush.xpose.msra.mxu0 0.0
    %467 = vmatpush.xpose.msra.mxu0 0.0
    %468 = vmatpush.xpose.msra.mxu0 0.0
    %469 = vmatpush.xpose.msra.mxu0 0.0
    %470 = vmatpush.xpose.msra.mxu0 0.0
    %471 = vmatpush.xpose.msra.mxu0 0.0
    %472 = vmatpush.xpose.msra.mxu0 0.0
    %473 = vmatpush.xpose.msra.mxu0 0.0
    %474 = vmatpush.xpose.msra.mxu0 0.0
    %475 = vmatpush.xpose.msra.mxu0 0.0
    %476 = vmatpush.xpose.msra.mxu0 0.0
    %477 = vmatpush.xpose.msra.mxu0 0.0
    %478 = vmatpush.xpose.msra.mxu0 0.0
    %479 = vmatpush.xpose.msra.mxu0 0.0
    %480 = vmatpush.xpose.msra.mxu0 0.0
    %481 = vmatpush.xpose.msra.mxu0 %v464
    %482 = vmatmul.f32.gmra.mxu0 %v462
    %v483 = vpop.f32.mrf.mxu0
    %v484 = vadd.f32 0.0, %v483
    %485 = vdwg.mxu0
    %v486 = vsel %vm317, %v282, 0
    %v488 = vsel %vm317, %v296, 0
    %490 = vmatpush.xpose.msra.mxu0 0.0
    %491 = vmatpush.xpose.msra.mxu0 0.0
    %492 = vmatpush.xpose.msra.mxu0 0.0
    %493 = vmatpush.xpose.msra.mxu0 0.0
    %494 = vmatpush.xpose.msra.mxu0 0.0
    %495 = vmatpush.xpose.msra.mxu0 0.0
    %496 = vmatpush.xpose.msra.mxu0 0.0
    %497 = vmatpush.xpose.msra.mxu0 0.0
    %498 = vmatpush.xpose.msra.mxu0 0.0
    %499 = vmatpush.xpose.msra.mxu0 0.0
    %500 = vmatpush.xpose.msra.mxu0 0.0
    %501 = vmatpush.xpose.msra.mxu0 0.0
    %502 = vmatpush.xpose.msra.mxu0 0.0
    %503 = vmatpush.xpose.msra.mxu0 0.0
    %504 = vmatpush.xpose.msra.mxu0 0.0
    %505 = vmatpush.xpose.msra.mxu0 %v488
    %506 = vmatmul.f32.gmra.mxu0 %v486
    %v507 = vpop.f32.mrf.mxu0
    %v508 = vadd.f32 0.0, %v507
    %509 = vdwg.mxu0
    %v510 = vld [vmem:[%s3] sm:$0x1]
    %v511 = vld [vmem:[%s3 + $0x1] sm:$0x1]
    %v514 = vperm.slane %v510, 0
    %v515 = vperm.slane %v511, 0
    %v518 = vadd.f32 %v340, %v514
    %v519 = vadd.f32 %v364, %v515
    %v520 = vadd.f32 %v388, %v514
    %v521 = vadd.f32 %v412, %v515
    %v522 = vadd.f32 %v436, %v514
    %v523 = vadd.f32 %v460, %v515
    %v524 = vadd.f32 %v484, %v514
    %v525 = vadd.f32 %v508, %v515
    %v526 = vsel %vm317, %v518, -inf
    %527 = vmax.xlane.f32.xlu0 %v526
    %v528 = vpop.xlane.xlu0 %527
    %v529 = vsel %vm317, %v519, -inf
    %530 = vmax.xlane.f32.xlu0 %v529
    %v531 = vpop.xlane.xlu0 %530
    %v532 = vsel %vm317, %v520, -inf
    %533 = vmax.xlane.f32.xlu0 %v532
    %v534 = vpop.xlane.xlu0 %533
    %v535 = vsel %vm317, %v521, -inf
    %536 = vmax.xlane.f32.xlu0 %v535
    %v537 = vpop.xlane.xlu0 %536
    %v538 = vsel %vm317, %v522, -inf
    %539 = vmax.xlane.f32.xlu0 %v538
    %v540 = vpop.xlane.xlu0 %539
    %v541 = vsel %vm317, %v523, -inf
    %542 = vmax.xlane.f32.xlu0 %v541
    %v543 = vpop.xlane.xlu0 %542
    %v544 = vsel %vm317, %v524, -inf
    %545 = vmax.xlane.f32.xlu0 %v544
    %v546 = vpop.xlane.xlu0 %545
    %v547 = vsel %vm317, %v525, -inf
    %548 = vmax.xlane.f32.xlu0 %v547
    %v549 = vpop.xlane.xlu0 %548
    %v550 = vsub.f32 %v518, %v528
    %v551 = vsub.f32 %v519, %v531
    %v552 = vsub.f32 %v520, %v534
    %v553 = vsub.f32 %v521, %v537
    %v554 = vsub.f32 %v522, %v540
    %v555 = vsub.f32 %v523, %v543
    %v556 = vsub.f32 %v524, %v546
    %v557 = vsub.f32 %v525, %v549
    %v558 = vmul.f32 %v550, 1.442695
    %v559 = vpow.pop %v558
    %v560 = vmul.f32 %v551, 1.442695
    %v561 = vpow.pop %v560
    %v562 = vmul.f32 %v552, 1.442695
    %v563 = vpow.pop %v562
    %v564 = vmul.f32 %v553, 1.442695
    %v565 = vpow.pop %v564
    %v566 = vmul.f32 %v554, 1.442695
    %v567 = vpow.pop %v566
    %v568 = vmul.f32 %v555, 1.442695
    %v569 = vpow.pop %v568
    %v570 = vmul.f32 %v556, 1.442695
    %v571 = vpow.pop %v570
    %v572 = vmul.f32 %v557, 1.442695
    %v573 = vpow.pop %v572
    %v574 = vsel %vm317, %v559, 0.0
    %575 = vadd.xlane.f32.xlu0 %v574
    %v576 = vpop.xlane.xlu0 %575
    %v577 = vsel %vm317, %v561, 0.0
    %578 = vadd.xlane.f32.xlu0 %v577
    %v579 = vpop.xlane.xlu0 %578
    %v580 = vsel %vm317, %v563, 0.0
    %581 = vadd.xlane.f32.xlu0 %v580
    %v582 = vpop.xlane.xlu0 %581
    %v583 = vsel %vm317, %v565, 0.0
    %584 = vadd.xlane.f32.xlu0 %v583
    %v585 = vpop.xlane.xlu0 %584
    %v586 = vsel %vm317, %v567, 0.0
    %587 = vadd.xlane.f32.xlu0 %v586
    %v588 = vpop.xlane.xlu0 %587
    %v589 = vsel %vm317, %v569, 0.0
    %590 = vadd.xlane.f32.xlu0 %v589
    %v591 = vpop.xlane.xlu0 %590
    %v592 = vsel %vm317, %v571, 0.0
    %593 = vadd.xlane.f32.xlu0 %v592
    %v594 = vpop.xlane.xlu0 %593
    %v595 = vsel %vm317, %v573, 0.0
    %596 = vadd.xlane.f32.xlu0 %v595
    %v597 = vpop.xlane.xlu0 %596
    %v598 = vrcp.pop %v576
    %v599 = vrcp.pop %v579
    %v600 = vrcp.pop %v582
    %v601 = vrcp.pop %v585
    %v602 = vrcp.pop %v588
    %v603 = vrcp.pop %v591
    %v604 = vrcp.pop %v594
    %v605 = vrcp.pop %v597
    %v606 = vmul.f32 %v559, %v598
    %v607 = vmul.f32 %v561, %v599
    %v608 = vmul.f32 %v563, %v600
    %v609 = vmul.f32 %v565, %v601
    %v610 = vmul.f32 %v567, %v602
    %v611 = vmul.f32 %v569, %v603
    %v612 = vmul.f32 %v571, %v604
    %v613 = vmul.f32 %v573, %v605
    %v615 = vsel %vm317, %v606, 0
    %617 = vmatpush.msra.mxu0 0.0
    %618 = vmatpush.msra.mxu0 0.0
    %619 = vmatpush.msra.mxu0 0.0
    %620 = vmatpush.msra.mxu0 0.0
    %621 = vmatpush.msra.mxu0 0.0
    %622 = vmatpush.msra.mxu0 0.0
    %623 = vmatpush.msra.mxu0 0.0
    %624 = vmatpush.msra.mxu0 0.0
    %625 = vmatpush.msra.mxu0 0.0
    %626 = vmatpush.msra.mxu0 0.0
    %627 = vmatpush.msra.mxu0 0.0
    %628 = vmatpush.msra.mxu0 0.0
    %629 = vmatpush.msra.mxu0 0.0
    %630 = vmatpush.msra.mxu0 0.0
    %631 = vmatpush.msra.mxu0 0.0
    %632 = vmatpush.msra.mxu0 %v186
    %633 = vmatmul.f32.gmra.mxu0 %v615
    %v634 = vpop.f32.mrf.mxu0
    %v635 = vadd.f32 0.0, %v634
    %636 = vdwg.mxu0
    %v638 = vsel %vm317, %v607, 0
    %640 = vmatpush.msra.mxu0 0.0
    %641 = vmatpush.msra.mxu0 0.0
    %642 = vmatpush.msra.mxu0 0.0
    %643 = vmatpush.msra.mxu0 0.0
    %644 = vmatpush.msra.mxu0 0.0
    %645 = vmatpush.msra.mxu0 0.0
    %646 = vmatpush.msra.mxu0 0.0
    %647 = vmatpush.msra.mxu0 0.0
    %648 = vmatpush.msra.mxu0 0.0
    %649 = vmatpush.msra.mxu0 0.0
    %650 = vmatpush.msra.mxu0 0.0
    %651 = vmatpush.msra.mxu0 0.0
    %652 = vmatpush.msra.mxu0 0.0
    %653 = vmatpush.msra.mxu0 0.0
    %654 = vmatpush.msra.mxu0 0.0
    %655 = vmatpush.msra.mxu0 %v189
    %656 = vmatmul.f32.gmra.mxu0 %v638
    %v657 = vpop.f32.mrf.mxu0
    %v658 = vadd.f32 0.0, %v657
    %659 = vdwg.mxu0
    %v661 = vsel %vm317, %v608, 0
    %663 = vmatpush.msra.mxu0 0.0
    %664 = vmatpush.msra.mxu0 0.0
    %665 = vmatpush.msra.mxu0 0.0
    %666 = vmatpush.msra.mxu0 0.0
    %667 = vmatpush.msra.mxu0 0.0
    %668 = vmatpush.msra.mxu0 0.0
    %669 = vmatpush.msra.mxu0 0.0
    %670 = vmatpush.msra.mxu0 0.0
    %671 = vmatpush.msra.mxu0 0.0
    %672 = vmatpush.msra.mxu0 0.0
    %673 = vmatpush.msra.mxu0 0.0
    %674 = vmatpush.msra.mxu0 0.0
    %675 = vmatpush.msra.mxu0 0.0
    %676 = vmatpush.msra.mxu0 0.0
    %677 = vmatpush.msra.mxu0 0.0
    %678 = vmatpush.msra.mxu0 %v300
    %679 = vmatmul.f32.gmra.mxu0 %v661
    %v680 = vpop.f32.mrf.mxu0
    %v681 = vadd.f32 0.0, %v680
    %682 = vdwg.mxu0
    %v684 = vsel %vm317, %v609, 0
    %686 = vmatpush.msra.mxu0 0.0
    %687 = vmatpush.msra.mxu0 0.0
    %688 = vmatpush.msra.mxu0 0.0
    %689 = vmatpush.msra.mxu0 0.0
    %690 = vmatpush.msra.mxu0 0.0
    %691 = vmatpush.msra.mxu0 0.0
    %692 = vmatpush.msra.mxu0 0.0
    %693 = vmatpush.msra.mxu0 0.0
    %694 = vmatpush.msra.mxu0 0.0
    %695 = vmatpush.msra.mxu0 0.0
    %696 = vmatpush.msra.mxu0 0.0
    %697 = vmatpush.msra.mxu0 0.0
    %698 = vmatpush.msra.mxu0 0.0
    %699 = vmatpush.msra.mxu0 0.0
    %700 = vmatpush.msra.mxu0 0.0
    %701 = vmatpush.msra.mxu0 %v302
    %702 = vmatmul.f32.gmra.mxu0 %v684
    %v703 = vpop.f32.mrf.mxu0
    %v704 = vadd.f32 0.0, %v703
    %705 = vdwg.mxu0
    %v707 = vsel %vm317, %v610, 0
    %709 = vmatpush.msra.mxu0 0.0
    %710 = vmatpush.msra.mxu0 0.0
    %711 = vmatpush.msra.mxu0 0.0
    %712 = vmatpush.msra.mxu0 0.0
    %713 = vmatpush.msra.mxu0 0.0
    %714 = vmatpush.msra.mxu0 0.0
    %715 = vmatpush.msra.mxu0 0.0
    %716 = vmatpush.msra.mxu0 0.0
    %717 = vmatpush.msra.mxu0 0.0
    %718 = vmatpush.msra.mxu0 0.0
    %719 = vmatpush.msra.mxu0 0.0
    %720 = vmatpush.msra.mxu0 0.0
    %721 = vmatpush.msra.mxu0 0.0
    %722 = vmatpush.msra.mxu0 0.0
    %723 = vmatpush.msra.mxu0 0.0
    %724 = vmatpush.msra.mxu0 %v306
    %725 = vmatmul.f32.gmra.mxu0 %v707
    %v726 = vpop.f32.mrf.mxu0
    %v727 = vadd.f32 0.0, %v726
    %728 = vdwg.mxu0
    %v730 = vsel %vm317, %v611, 0
    %732 = vmatpush.msra.mxu0 0.0
    %733 = vmatpush.msra.mxu0 0.0
    %734 = vmatpush.msra.mxu0 0.0
    %735 = vmatpush.msra.mxu0 0.0
    %736 = vmatpush.msra.mxu0 0.0
    %737 = vmatpush.msra.mxu0 0.0
    %738 = vmatpush.msra.mxu0 0.0
    %739 = vmatpush.msra.mxu0 0.0
    %740 = vmatpush.msra.mxu0 0.0
    %741 = vmatpush.msra.mxu0 0.0
    %742 = vmatpush.msra.mxu0 0.0
    %743 = vmatpush.msra.mxu0 0.0
    %744 = vmatpush.msra.mxu0 0.0
    %745 = vmatpush.msra.mxu0 0.0
    %746 = vmatpush.msra.mxu0 0.0
    %747 = vmatpush.msra.mxu0 %v308
    %748 = vmatmul.f32.gmra.mxu0 %v730
    %v749 = vpop.f32.mrf.mxu0
    %v750 = vadd.f32 0.0, %v749
    %751 = vdwg.mxu0
    %v753 = vsel %vm317, %v612, 0
    %755 = vmatpush.msra.mxu0 0.0
    %756 = vmatpush.msra.mxu0 0.0
    %757 = vmatpush.msra.mxu0 0.0
    %758 = vmatpush.msra.mxu0 0.0
    %759 = vmatpush.msra.mxu0 0.0
    %760 = vmatpush.msra.mxu0 0.0
    %761 = vmatpush.msra.mxu0 0.0
    %762 = vmatpush.msra.mxu0 0.0
    %763 = vmatpush.msra.mxu0 0.0
    %764 = vmatpush.msra.mxu0 0.0
    %765 = vmatpush.msra.mxu0 0.0
    %766 = vmatpush.msra.mxu0 0.0
    %767 = vmatpush.msra.mxu0 0.0
    %768 = vmatpush.msra.mxu0 0.0
    %769 = vmatpush.msra.mxu0 0.0
    %770 = vmatpush.msra.mxu0 %v312
    %771 = vmatmul.f32.gmra.mxu0 %v753
    %v772 = vpop.f32.mrf.mxu0
    %v773 = vadd.f32 0.0, %v772
    %774 = vdwg.mxu0
    %v776 = vsel %vm317, %v613, 0
    %778 = vmatpush.msra.mxu0 0.0
    %779 = vmatpush.msra.mxu0 0.0
    %780 = vmatpush.msra.mxu0 0.0
    %781 = vmatpush.msra.mxu0 0.0
    %782 = vmatpush.msra.mxu0 0.0
    %783 = vmatpush.msra.mxu0 0.0
    %784 = vmatpush.msra.mxu0 0.0
    %785 = vmatpush.msra.mxu0 0.0
    %786 = vmatpush.msra.mxu0 0.0
    %787 = vmatpush.msra.mxu0 0.0
    %788 = vmatpush.msra.mxu0 0.0
    %789 = vmatpush.msra.mxu0 0.0
    %790 = vmatpush.msra.mxu0 0.0
    %791 = vmatpush.msra.mxu0 0.0
    %792 = vmatpush.msra.mxu0 0.0
    %793 = vmatpush.msra.mxu0 %v314
    %794 = vmatmul.f32.gmra.mxu0 %v776
    %v795 = vpop.f32.mrf.mxu0
    %v796 = vadd.f32 0.0, %v795
    %797 = vdwg.mxu0
    %798 = vst.msk [vmem:[#allocation2] sm:$0xff] %vm317, %v635
    %799 = vst.msk [vmem:[#allocation2 + $0x8] sm:$0xff] %vm317, %v658
    %802 = vrot.lane.b32.xlu0 %v681, 8
    %v803 = vpop.permute.xlu0 %802
    %804 = vrot.lane.b32.xlu0 %v704, 8
    %v805 = vpop.permute.xlu0 %804
    %vm808 = vcmask 130112
    %809 = vst.msk [vmem:[#allocation2] sm:$0xff] %vm808, %v803
    %810 = vst.msk [vmem:[#allocation2 + $0x8] sm:$0xff] %vm808, %v805
    %813 = vrot.lane.b32.xlu0 %v727, 16
    %v814 = vpop.permute.xlu0 %813
    %815 = vrot.lane.b32.xlu0 %v750, 16
    %v816 = vpop.permute.xlu0 %815
    %vm819 = vcmask 195712
    %820 = vst.msk [vmem:[#allocation2] sm:$0xff] %vm819, %v814
    %821 = vst.msk [vmem:[#allocation2 + $0x8] sm:$0xff] %vm819, %v816
    %824 = vrot.lane.b32.xlu0 %v773, 24
    %v825 = vpop.permute.xlu0 %824
    %826 = vrot.lane.b32.xlu0 %v796, 24
    %v827 = vpop.permute.xlu0 %826
    %vm830 = vcmask 261312
    %831 = vst.msk [vmem:[#allocation2] sm:$0xff] %vm830, %v825
    %832 = vst.msk [vmem:[#allocation2 + $0x8] sm:$0xff] %vm830, %v827
    %v833 = vld [vmem:[#allocation2] sm:$0xff]
    %v834 = vld [vmem:[#allocation2 + $0x8] sm:$0xff]
    %v835 = vld [vmem:[#allocation14] sm:$0xff]
    %v836 = vld [vmem:[#allocation14 + $0x8] sm:$0xff]
    %v837 = vld [vmem:[#allocation14 + $0x10] sm:$0xff]
    %v838 = vld [vmem:[#allocation14 + $0x18] sm:$0xff]
    %v839 = vld [vmem:[%s11] sm:$0x1]
    %v841 = vperm.slane %v839, 0
    %v844 = vsel %vm161, %v833, 0
    %v847 = vsel %vm161, %v834, 0
    %849 = vmatpush.msra.mxu0 0.0
    %850 = vmatpush.msra.mxu0 0.0
    %851 = vmatpush.msra.mxu0 0.0
    %852 = vmatpush.msra.mxu0 0.0
    %853 = vmatpush.msra.mxu0 0.0
    %854 = vmatpush.msra.mxu0 0.0
    %855 = vmatpush.msra.mxu0 0.0
    %856 = vmatpush.msra.mxu0 0.0
    %857 = vmatpush.msra.mxu0 0.0
    %858 = vmatpush.msra.mxu0 0.0
    %859 = vmatpush.msra.mxu0 0.0
    %860 = vmatpush.msra.mxu0 0.0
    %861 = vmatpush.msra.mxu0 %v838
    %862 = vmatpush.msra.mxu0 %v837
    %863 = vmatpush.msra.mxu0 %v836
    %864 = vmatpush.msra.mxu0 %v835
    %865 = vmatmul.f32.gmra.mxu0 %v844
    %v866 = vpop.f32.mrf.mxu0
    %v867 = vadd.f32 %v841, %v866
    %868 = vmatmul.f32.gmra.mxu0 %v847
    %v869 = vpop.f32.mrf.mxu0
    %v870 = vadd.f32 %v841, %v869
    %871 = vdwg.mxu0
    %872 = vst.msk [vmem:[#allocation15] sm:$0xff] %vm161, %v867
    %873 = vst.msk [vmem:[#allocation15 + $0x8] sm:$0xff] %vm161, %v870
    // Predicated region
    $region78: #{tpu_custom_call.1} parent=1 // pred_check
      _
    $region79: #{tpu_custom_call.1} parent=1 // pred_check_branch
      %875 = sbr.rel (0) target = $region81
    $region80: #{tpu_custom_call.1} parent=1 // pred_region
      %877 = vsyncadd [#allocation5], 0
      %s878 = sshll.u32 [#allocation15], 4
      %s879 = int_to_ptr.vmem [resolvable:$true] %s878
      %s880 = sshll.u32 %s12, 4
      %s881 = int_to_ptr.hbm [resolvable:$true] %s880
      %886 = dma.vmem_to_hbm [thread:$0]  %s879, 256, %s881, [#allocation5], 128, 128, 8
    $region81: #{tpu_custom_call.1} parent=1 // pred_fallthru
      _
    // Predicated region
    $region82: #{tpu_custom_call.1} parent=1 // pred_check
      _
    $region83: #{tpu_custom_call.1} parent=1 // pred_check_branch
      %888 = sbr.rel (0) target = $region85
    $region84: #{tpu_custom_call.1} parent=1 // pred_region
      %890 = dma.done [#allocation5], 256
    $region85: #{tpu_custom_call.1} parent=1 // pred_fallthru
      _
    %891 = vsyncpa [#allocation4], 1
    %892 = vsyncpa [#allocation7], 1
    %893 = vsyncpa [#allocation10], 1
    %894 = vsyncpa [#allocation13], 1
    %895 = vsyncpa [#allocation5], 1

</llo_original>
